<compile_context>
chip_gen: v7x
topology: tpu7x:2x2x1
jax: 0.10.0
libtpu: 0.0.40
codegen_flags: <defaults>
</compile_context>

<pallas_src>
import functools

import jax
import jax.numpy as jnp
from jax import lax
from jax.experimental import pallas as pl
from jax.experimental.pallas import tpu as pltpu


def _mdca_nll_kernel(
    logits_ref, target_ref,            # inputs  (TB, C) native dtype, (TB, 1) int32
    nll_ref, cal_ref,                  # outputs (1, 1) f32 each
    acc_conf, acc_count, acc_nll, acc_nv,   # VMEM scratch accumulators
    *, ignore_index, batch_size, n_classes, block_rows,
):
    i = pl.program_id(0)
    n_blocks = pl.num_programs(0)

    @pl.when(i == 0)
    def _init():
        acc_conf[...] = jnp.zeros_like(acc_conf)
        acc_count[...] = jnp.zeros_like(acc_count)
        acc_nll[...] = jnp.zeros_like(acc_nll)
        acc_nv[...] = jnp.zeros_like(acc_nv)

    logits = logits_ref[...].astype(jnp.float32)           # (TB, C) — only cast here
    tgt = target_ref[...]                                   # (TB, 1) int32
    TB, C = logits.shape

    # Rows beyond the true batch size (grid padding) must not contribute.
    row_ids = i * block_rows + lax.broadcasted_iota(jnp.int32, (TB, 1), 0)
    real = row_ids < batch_size                              # (TB, 1) bool

    # Numerically stable softmax / log-softmax.
    m = jnp.max(logits, axis=-1, keepdims=True)
    shifted = logits - m
    e = jnp.exp(shifted)
    s = jnp.sum(e, axis=-1, keepdims=True)
    inv_s = pl.reciprocal(s)                                 # exact; one recip per row
    probs = e * inv_s
    logp = shifted - jnp.log(s)

    cls_ids = lax.broadcasted_iota(jnp.int32, (TB, C), 1)
    is_tgt = cls_ids == tgt                                  # ignore_index=-1 -> all False
    valid = jnp.logical_and(tgt != ignore_index, real)       # (TB, 1)
    validf = valid.astype(jnp.float32)

    # CrossEntropy partial: sum over valid rows of -logp[b, target[b]] (NaN-safe pick).
    picked = jnp.sum(jnp.where(is_tgt, logp, 0.0), axis=-1, keepdims=True)   # (TB, 1)
    acc_nll[...] += jnp.sum(-picked * validf, axis=0, keepdims=True)          # (1, 1)
    acc_nv[...] += jnp.sum(validf, axis=0, keepdims=True)                     # (1, 1)

    # MDCA partials over real rows (ignored rows DO count for probs, per reference).
    probs_m = jnp.where(real, probs, 0.0)
    onehot_m = jnp.where(jnp.logical_and(is_tgt, real), 1.0, 0.0)
    acc_conf[...] += jnp.sum(probs_m, axis=0, keepdims=True)                  # (1, C)
    acc_count[...] += jnp.sum(onehot_m, axis=0, keepdims=True)                # (1, C)

    @pl.when(i == n_blocks - 1)
    def _finalize():
        nll_ref[...] = acc_nll[...] / jnp.maximum(acc_nv[...], 1.0)
        diff = jnp.abs(acc_conf[...] - acc_count[...])
        cal_ref[...] = jnp.sum(diff, axis=-1, keepdims=True) / jnp.float32(
            batch_size * n_classes
        )


def mdca_nll_loss(logits, target, *, n_classes, beta=0.0, ignore_index=-1,
                  block_rows=512):
    """JAX wrapper mirroring MDCA_NLLLoss.forward -> (dict(loss=loss), loss_cal, loss_nll)."""
    B, C = logits.shape
    assert C == n_classes, "logits last dim must equal n_classes"

    # Tile sizing: multiple of 8 rows, keep a (double-buffered) logits tile a few MiB.
    itemsize = jnp.dtype(logits.dtype).itemsize
    cap = max(8, (4 * 1024 * 1024) // max(C * itemsize, 1))
    tb = max(8, (min(block_rows, cap) // 8) * 8)
    if B <= tb:
        tb = max(8, -(-B // 8) * 8)          # round B up to a multiple of 8
    n_blocks = -(-B // tb)
    b_pad = n_blocks * tb

    target2d = target.reshape(B, 1).astype(jnp.int32)
    if b_pad != B:
        # Padded rows are masked in-kernel via the true batch_size; pad values don't matter.
        logits_in = jnp.pad(logits, ((0, b_pad - B), (0, 0)))
        target_in = jnp.pad(target2d, ((0, b_pad - B), (0, 0)),
                            constant_values=ignore_index)
    else:
        logits_in = logits               # no wrapper-side cast / copy in the common case
        target_in = target2d

    kernel = functools.partial(
        _mdca_nll_kernel,
        ignore_index=ignore_index,
        batch_size=B,
        n_classes=C,
        block_rows=tb,
    )

    cost = pl.CostEstimate(
        flops=8 * B * C,                   # softmax + masks + reductions, ~O(B*C)
        transcendentals=B * C + 2 * B,     # exp per element, log/recip per row
        bytes_accessed=B * C * itemsize + B * 4 + 8,
    )

    nll, cal = pl.pallas_call(
        kernel,
        out_shape=(
            jax.ShapeDtypeStruct((1, 1), jnp.float32),
            jax.ShapeDtypeStruct((1, 1), jnp.float32),
        ),
        grid_spec=pltpu.PrefetchScalarGridSpec(
            num_scalar_prefetch=0,
            grid=(n_blocks,),
            in_specs=[
                pl.BlockSpec((tb, C), lambda i: (i, 0)),
                pl.BlockSpec((tb, 1), lambda i: (i, 0)),
            ],
            out_specs=(
                pl.BlockSpec((1, 1), lambda i: (0, 0)),
                pl.BlockSpec((1, 1), lambda i: (0, 0)),
            ),
            scratch_shapes=[
                pltpu.VMEM((1, C), jnp.float32),   # per-class prob sums
                pltpu.VMEM((1, C), jnp.float32),   # per-class one-hot counts
                pltpu.VMEM((1, 1), jnp.float32),   # NLL numerator
                pltpu.VMEM((1, 1), jnp.float32),   # number of valid rows
            ],
        ),
        compiler_params=pltpu.CompilerParams(
            dimension_semantics=("arbitrary",),    # accumulation axis
        ),
        cost_estimate=cost,
    )(logits_in, target_in)

    loss_nll = nll[0, 0]
    loss_cal = cal[0, 0]
    loss = loss_nll + jnp.float32(beta) * loss_cal
    return dict(loss=loss), loss_cal, loss_nll


def _reference(logits, target, n_classes, ignore_index):
    """Pure-JAX reference of the PyTorch semantics (for correctness check)."""
    logits = logits.astype(jnp.float32)
    logp = jax.nn.log_softmax(logits, axis=-1)
    probs = jax.nn.softmax(logits, axis=-1)
    valid = (target != ignore_index)
    safe_t = jnp.where(valid, target, 0)
    picked = jnp.take_along_axis(logp, safe_t[:, None], axis=-1)[:, 0]
    nll = -(picked * valid.astype(jnp.float32)).sum() / valid.astype(jnp.float32).sum()
    onehot = jax.nn.one_hot(target, n_classes, dtype=jnp.float32)  # -1 -> all zeros
    cal = jnp.mean(jnp.abs(probs.mean(axis=0) - onehot.mean(axis=0)))
    return nll, cal


if __name__ == "__main__":
    beta = 1.0
    ignore_index = -1
    key = jax.random.PRNGKey(0)

    # --- Case 1: small single-block case (B=8, C=16), one row ignored. ---
    B, C = 8, 16
    k_logits, k_target, key = jax.random.split(key, 3)
    logits = jax.random.normal(k_logits, (B, C), dtype=jnp.float32)
    target = jax.random.randint(k_target, (B,), 0, C, dtype=jnp.int32)
    target = target.at[3].set(ignore_index)

    out_dict, loss_cal, loss_nll = mdca_nll_loss(
        logits, target, n_classes=C, beta=beta, ignore_index=ignore_index
    )
    jax.block_until_ready((out_dict["loss"], loss_cal, loss_nll))

    ref_nll, ref_cal = _reference(logits, target, C, ignore_index)
    assert jnp.allclose(loss_nll, ref_nll, atol=1e-5, rtol=1e-5)
    assert jnp.allclose(loss_cal, ref_cal, atol=1e-5, rtol=1e-5)
    assert jnp.allclose(out_dict["loss"], ref_nll + beta * ref_cal, atol=1e-5, rtol=1e-5)

    # --- Case 2: multi-block grid with batch padding (B=20, TB=8 -> 3 blocks). ---
    B2 = 20
    k_logits2, k_target2, key = jax.random.split(key, 3)
    logits2 = jax.random.normal(k_logits2, (B2, C), dtype=jnp.float32)
    target2 = jax.random.randint(k_target2, (B2,), 0, C, dtype=jnp.int32)
    target2 = target2.at[5].set(ignore_index)

    out_dict2, loss_cal2, loss_nll2 = mdca_nll_loss(
        logits2, target2, n_classes=C, beta=beta, ignore_index=ignore_index,
        block_rows=8,
    )
    jax.block_until_ready((out_dict2["loss"], loss_cal2, loss_nll2))

    ref_nll2, ref_cal2 = _reference(logits2, target2, C, ignore_index)
    assert jnp.allclose(loss_nll2, ref_nll2, atol=1e-5, rtol=1e-5)
    assert jnp.allclose(loss_cal2, ref_cal2, atol=1e-5, rtol=1e-5)
    assert jnp.allclose(out_dict2["loss"], ref_nll2 + beta * ref_cal2,
                        atol=1e-5, rtol=1e-5)

    print("KERNEL_OK")
</pallas_src>

<mosaic_0001>
module attributes {stable_mosaic.version = 11 : i64} {
  func.func @_mdca_nll_kernel(%arg0: i32, %arg1: memref<8x16xf32, #tpu.memory_space<vmem>>, %arg2: memref<8x1xi32, #tpu.memory_space<vmem>>, %arg3: memref<1x1xf32, #tpu.memory_space<vmem>>, %arg4: memref<1x1xf32, #tpu.memory_space<vmem>>, %arg5: memref<1x16xf32, #tpu.memory_space<vmem>>, %arg6: memref<1x16xf32, #tpu.memory_space<vmem>>, %arg7: memref<1x1xf32, #tpu.memory_space<vmem>>, %arg8: memref<1x1xf32, #tpu.memory_space<vmem>>) attributes {dimension_semantics = [#tpu.dimension_semantics<arbitrary>], iteration_bounds = array<i64: 1>, scalar_prefetch = 0 : i64, scratch_operands = 4 : i64, tpu.core_type = #tpu.core_type<tc>, window_params = [{transform_indices = @transform_0, window_bounds = array<i64: 8, 16>}, {transform_indices = @transform_1, window_bounds = array<i64: 8, 1>}, {pipeline_mode = #tpu.pipeline_mode<synchronous>, transform_indices = @transform_2, window_bounds = array<i64: 1, 1>}, {pipeline_mode = #tpu.pipeline_mode<synchronous>, transform_indices = @transform_3, window_bounds = array<i64: 1, 1>}]} {
    %c0_i32 = arith.constant 0 : i32
    %0 = arith.cmpi eq, %arg0, %c0_i32 : i32
    %1 = arith.extui %0 : i1 to i32
    %c0_i32_0 = arith.constant 0 : i32
    %2 = arith.cmpi ne, %1, %c0_i32_0 : i32
    scf.if %2 {
      %cst_34 = arith.constant 0.000000e+00 : f32
      %71 = vector.broadcast %cst_34 : f32 to vector<1x16xf32>
      %c0_35 = arith.constant 0 : index
      %c0_36 = arith.constant 0 : index
      %72 = vector.load %arg5[%c0_35, %c0_36] : memref<1x16xf32, #tpu.memory_space<vmem>>, vector<1x16xf32>
      tpu.vector_store %arg5[%c0_35, %c0_36], %71 {strides = array<i32>} : memref<1x16xf32, #tpu.memory_space<vmem>>, vector<1x16xf32>,
      %cst_37 = arith.constant 0.000000e+00 : f32
      %73 = vector.broadcast %cst_37 : f32 to vector<1x16xf32>
      %c0_38 = arith.constant 0 : index
      %c0_39 = arith.constant 0 : index
      %74 = vector.load %arg6[%c0_38, %c0_39] : memref<1x16xf32, #tpu.memory_space<vmem>>, vector<1x16xf32>
      tpu.vector_store %arg6[%c0_38, %c0_39], %73 {strides = array<i32>} : memref<1x16xf32, #tpu.memory_space<vmem>>, vector<1x16xf32>,
      %cst_40 = arith.constant 0.000000e+00 : f32
      %75 = vector.broadcast %cst_40 : f32 to vector<1x1xf32>
      %c0_41 = arith.constant 0 : index
      %c0_42 = arith.constant 0 : index
      %76 = vector.load %arg7[%c0_41, %c0_42] : memref<1x1xf32, #tpu.memory_space<vmem>>, vector<1x1xf32>
      tpu.vector_store %arg7[%c0_41, %c0_42], %75 {strides = array<i32>} : memref<1x1xf32, #tpu.memory_space<vmem>>, vector<1x1xf32>,
      %cst_43 = arith.constant 0.000000e+00 : f32
      %77 = vector.broadcast %cst_43 : f32 to vector<1x1xf32>
      %c0_44 = arith.constant 0 : index
      %c0_45 = arith.constant 0 : index
      %78 = vector.load %arg8[%c0_44, %c0_45] : memref<1x1xf32, #tpu.memory_space<vmem>>, vector<1x1xf32>
      tpu.vector_store %arg8[%c0_44, %c0_45], %77 {strides = array<i32>} : memref<1x1xf32, #tpu.memory_space<vmem>>, vector<1x1xf32>,
    } else {
    }
    %c0 = arith.constant 0 : index
    %c0_1 = arith.constant 0 : index
    %3 = vector.load %arg1[%c0, %c0_1] : memref<8x16xf32, #tpu.memory_space<vmem>>, vector<8x16xf32>
    %c0_2 = arith.constant 0 : index
    %c0_3 = arith.constant 0 : index
    %4 = vector.load %arg2[%c0_2, %c0_3] : memref<8x1xi32, #tpu.memory_space<vmem>>, vector<8x1xi32>
    %c8_i32 = arith.constant 8 : i32
    %5 = arith.muli %arg0, %c8_i32 : i32
    %6 = tpu.iota {dimensions = array<i32: 0>} : vector<8x1xi32>
    %7 = vector.broadcast %5 : i32 to vector<8x1xi32>
    %8 = arith.addi %7, %6 : vector<8x1xi32>
    %c8_i32_4 = arith.constant 8 : i32
    %9 = vector.broadcast %c8_i32_4 : i32 to vector<8x1xi32>
    %10 = arith.cmpi slt, %8, %9 : vector<8x1xi32>
    %cst = arith.constant dense<0xFF800000> : vector<8xf32>
    %11 = vector.multi_reduction <maximumf>, %3, %cst [1] : vector<8x16xf32> to vector<8xf32>
    %12 = vector.shape_cast %11 : vector<8xf32> to vector<8x1xf32>
    %13 = vector.broadcast %12 : vector<8x1xf32> to vector<8x16xf32>
    %14 = arith.subf %3, %13 : vector<8x16xf32>
    %15 = math.exp %14 : vector<8x16xf32>
    %cst_5 = arith.constant dense<0.000000e+00> : vector<8xf32>
    %16 = vector.multi_reduction <add>, %15, %cst_5 [1] : vector<8x16xf32> to vector<8xf32>
    %17 = vector.shape_cast %16 : vector<8xf32> to vector<8x1xf32>
    %18 = tpu.reciprocal %17 : vector<8x1xf32> -> vector<8x1xf32>
    %19 = vector.broadcast %18 : vector<8x1xf32> to vector<8x16xf32>
    %20 = arith.mulf %15, %19 : vector<8x16xf32>
    %21 = math.log %17 : vector<8x1xf32>
    %22 = vector.broadcast %21 : vector<8x1xf32> to vector<8x16xf32>
    %23 = arith.subf %14, %22 : vector<8x16xf32>
    %24 = tpu.iota {dimensions = array<i32: 1>} : vector<8x16xi32>
    %25 = vector.broadcast %4 : vector<8x1xi32> to vector<8x16xi32>
    %26 = arith.cmpi eq, %24, %25 : vector<8x16xi32>
    %c-1_i32 = arith.constant -1 : i32
    %27 = vector.broadcast %c-1_i32 : i32 to vector<8x1xi32>
    %28 = arith.cmpi ne, %4, %27 : vector<8x1xi32>
    %29 = arith.andi %28, %10 : vector<8x1xi1>
    %30 = arith.extui %29 : vector<8x1xi1> to vector<8x1xi32>
    %31 = arith.sitofp %30 : vector<8x1xi32> to vector<8x1xf32>
    %cst_6 = arith.constant 0.000000e+00 : f32
    %32 = vector.broadcast %cst_6 : f32 to vector<8x16xf32>
    %33 = arith.select %26, %23, %32 : vector<8x16xi1>, vector<8x16xf32>
    %cst_7 = arith.constant dense<0.000000e+00> : vector<8xf32>
    %34 = vector.multi_reduction <add>, %33, %cst_7 [1] : vector<8x16xf32> to vector<8xf32>
    %35 = vector.shape_cast %34 : vector<8xf32> to vector<8x1xf32>
    %c0_8 = arith.constant 0 : index
    %c0_9 = arith.constant 0 : index
    %36 = vector.load %arg7[%c0_8, %c0_9] : memref<1x1xf32, #tpu.memory_space<vmem>>, vector<1x1xf32>
    %cst_10 = arith.constant 0.000000e+00 : f32
    %37 = vector.broadcast %cst_10 : f32 to vector<8x1xf32>
    %38 = arith.subf %37, %35 : vector<8x1xf32>
    %39 = arith.mulf %38, %31 : vector<8x1xf32>
    %cst_11 = arith.constant dense<0.000000e+00> : vector<1xf32>
    %40 = vector.multi_reduction <add>, %39, %cst_11 [0] : vector<8x1xf32> to vector<1xf32>
    %41 = vector.shape_cast %40 : vector<1xf32> to vector<1x1xf32>
    %42 = arith.addf %36, %41 : vector<1x1xf32>
    %c0_12 = arith.constant 0 : index
    %c0_13 = arith.constant 0 : index
    %43 = vector.load %arg7[%c0_12, %c0_13] : memref<1x1xf32, #tpu.memory_space<vmem>>, vector<1x1xf32>
    tpu.vector_store %arg7[%c0_12, %c0_13], %42 {strides = array<i32>} : memref<1x1xf32, #tpu.memory_space<vmem>>, vector<1x1xf32>,
    %c0_14 = arith.constant 0 : index
    %c0_15 = arith.constant 0 : index
    %44 = vector.load %arg8[%c0_14, %c0_15] : memref<1x1xf32, #tpu.memory_space<vmem>>, vector<1x1xf32>
    %cst_16 = arith.constant dense<0.000000e+00> : vector<1xf32>
    %45 = vector.multi_reduction <add>, %31, %cst_16 [0] : vector<8x1xf32> to vector<1xf32>
    %46 = vector.shape_cast %45 : vector<1xf32> to vector<1x1xf32>
    %47 = arith.addf %44, %46 : vector<1x1xf32>
    %c0_17 = arith.constant 0 : index
    %c0_18 = arith.constant 0 : index
    %48 = vector.load %arg8[%c0_17, %c0_18] : memref<1x1xf32, #tpu.memory_space<vmem>>, vector<1x1xf32>
    tpu.vector_store %arg8[%c0_17, %c0_18], %47 {strides = array<i32>} : memref<1x1xf32, #tpu.memory_space<vmem>>, vector<1x1xf32>,
    %cst_19 = arith.constant 0.000000e+00 : f32
    %49 = vector.shape_cast %10 : vector<8x1xi1> to vector<8x1xi1>
    %50 = vector.broadcast %49 : vector<8x1xi1> to vector<8x16xi1>
    %51 = vector.broadcast %cst_19 : f32 to vector<8x16xf32>
    %52 = arith.select %50, %20, %51 : vector<8x16xi1>, vector<8x16xf32>
    %53 = vector.broadcast %10 : vector<8x1xi1> to vector<8x16xi1>
    %54 = arith.andi %26, %53 : vector<8x16xi1>
    %cst_20 = arith.constant 1.000000e+00 : f32
    %cst_21 = arith.constant 0.000000e+00 : f32
    %55 = vector.broadcast %cst_20 : f32 to vector<8x16xf32>
    %56 = vector.broadcast %cst_21 : f32 to vector<8x16xf32>
    %57 = arith.select %54, %55, %56 : vector<8x16xi1>, vector<8x16xf32>
    %c0_22 = arith.constant 0 : index
    %c0_23 = arith.constant 0 : index
    %58 = vector.load %arg5[%c0_22, %c0_23] : memref<1x16xf32, #tpu.memory_space<vmem>>, vector<1x16xf32>
    %cst_24 = arith.constant dense<0.000000e+00> : vector<16xf32>
    %59 = vector.multi_reduction <add>, %52, %cst_24 [0] : vector<8x16xf32> to vector<16xf32>
    %60 = vector.shape_cast %59 : vector<16xf32> to vector<1x16xf32>
    %61 = arith.addf %58, %60 : vector<1x16xf32>
    %c0_25 = arith.constant 0 : index
    %c0_26 = arith.constant 0 : index
    %62 = vector.load %arg5[%c0_25, %c0_26] : memref<1x16xf32, #tpu.memory_space<vmem>>, vector<1x16xf32>
    tpu.vector_store %arg5[%c0_25, %c0_26], %61 {strides = array<i32>} : memref<1x16xf32, #tpu.memory_space<vmem>>, vector<1x16xf32>,
    %c0_27 = arith.constant 0 : index
    %c0_28 = arith.constant 0 : index
    %63 = vector.load %arg6[%c0_27, %c0_28] : memref<1x16xf32, #tpu.memory_space<vmem>>, vector<1x16xf32>
    %cst_29 = arith.constant dense<0.000000e+00> : vector<16xf32>
    %64 = vector.multi_reduction <add>, %57, %cst_29 [0] : vector<8x16xf32> to vector<16xf32>
    %65 = vector.shape_cast %64 : vector<16xf32> to vector<1x16xf32>
    %66 = arith.addf %63, %65 : vector<1x16xf32>
    %c0_30 = arith.constant 0 : index
    %c0_31 = arith.constant 0 : index
    %67 = vector.load %arg6[%c0_30, %c0_31] : memref<1x16xf32, #tpu.memory_space<vmem>>, vector<1x16xf32>
    tpu.vector_store %arg6[%c0_30, %c0_31], %66 {strides = array<i32>} : memref<1x16xf32, #tpu.memory_space<vmem>>, vector<1x16xf32>,
    %c0_i32_32 = arith.constant 0 : i32
    %68 = arith.cmpi eq, %arg0, %c0_i32_32 : i32
    %69 = arith.extui %68 : i1 to i32
    %c0_i32_33 = arith.constant 0 : i32
    %70 = arith.cmpi ne, %69, %c0_i32_33 : i32
    scf.if %70 {
      %c0_34 = arith.constant 0 : index
      %c0_35 = arith.constant 0 : index
      %71 = vector.load %arg7[%c0_34, %c0_35] : memref<1x1xf32, #tpu.memory_space<vmem>>, vector<1x1xf32>
      %c0_36 = arith.constant 0 : index
      %c0_37 = arith.constant 0 : index
      %72 = vector.load %arg8[%c0_36, %c0_37] : memref<1x1xf32, #tpu.memory_space<vmem>>, vector<1x1xf32>
      %cst_38 = arith.constant 1.000000e+00 : f32
      %73 = vector.broadcast %cst_38 : f32 to vector<1x1xf32>
      %74 = arith.maximumf %72, %73 : vector<1x1xf32>
      %75 = arith.divf %71, %74 : vector<1x1xf32>
      %c0_39 = arith.constant 0 : index
      %c0_40 = arith.constant 0 : index
      %76 = vector.load %arg3[%c0_39, %c0_40] : memref<1x1xf32, #tpu.memory_space<vmem>>, vector<1x1xf32>
      tpu.vector_store %arg3[%c0_39, %c0_40], %75 {strides = array<i32>} : memref<1x1xf32, #tpu.memory_space<vmem>>, vector<1x1xf32>,
      %c0_41 = arith.constant 0 : index
      %c0_42 = arith.constant 0 : index
      %77 = vector.load %arg5[%c0_41, %c0_42] : memref<1x16xf32, #tpu.memory_space<vmem>>, vector<1x16xf32>
      %c0_43 = arith.constant 0 : index
      %c0_44 = arith.constant 0 : index
      %78 = vector.load %arg6[%c0_43, %c0_44] : memref<1x16xf32, #tpu.memory_space<vmem>>, vector<1x16xf32>
      %79 = arith.subf %77, %78 : vector<1x16xf32>
      %80 = math.absf %79 : vector<1x16xf32>
      %cst_45 = arith.constant dense<0.000000e+00> : vector<1xf32>
      %81 = vector.multi_reduction <add>, %80, %cst_45 [1] : vector<1x16xf32> to vector<1xf32>
      %82 = vector.shape_cast %81 : vector<1xf32> to vector<1x1xf32>
      %cst_46 = arith.constant 1.280000e+02 : f32
      %83 = vector.broadcast %cst_46 : f32 to vector<1x1xf32>
      %84 = arith.divf %82, %83 : vector<1x1xf32>
      %c0_47 = arith.constant 0 : index
      %c0_48 = arith.constant 0 : index
      %85 = vector.load %arg4[%c0_47, %c0_48] : memref<1x1xf32, #tpu.memory_space<vmem>>, vector<1x1xf32>
      tpu.vector_store %arg4[%c0_47, %c0_48], %84 {strides = array<i32>} : memref<1x1xf32, #tpu.memory_space<vmem>>, vector<1x1xf32>,
    } else {
    }
    return
  }
  func.func @transform_0(%arg0: i32) -> (i32, i32) {
    %c0_i32 = arith.constant 0 : i32
    %c0_i32_0 = arith.constant 0 : i32
    return %arg0, %c0_i32 : i32, i32
  }
  func.func @transform_1(%arg0: i32) -> (i32, i32) {
    %c0_i32 = arith.constant 0 : i32
    %c0_i32_0 = arith.constant 0 : i32
    return %arg0, %c0_i32 : i32, i32
  }
  func.func @transform_2(%arg0: i32) -> (i32, i32) {
    %c0_i32 = arith.constant 0 : i32
    %c0_i32_0 = arith.constant 0 : i32
    %c0_i32_1 = arith.constant 0 : i32
    return %c0_i32, %c0_i32_0 : i32, i32
  }
  func.func @transform_3(%arg0: i32) -> (i32, i32) {
    %c0_i32 = arith.constant 0 : i32
    %c0_i32_0 = arith.constant 0 : i32
    %c0_i32_1 = arith.constant 0 : i32
    return %c0_i32, %c0_i32_0 : i32, i32
  }
}

</mosaic_0001>

<llo_original>
// kernel: tpu_custom_call.1
$region0: #{tpu_custom_call.1}
  #allocation0 [shape = 'u32[]', space=smem, size = 0x4, offset = 0x4, fixed_abs, tag = 'smem constant byte address 0x4 - core index']
  #allocation1 [shape = 'u32[144,128]{1,0:T(1,128)}', space=vmem, size = 0x12000, scoped, tag = 'internal scratch']
  #allocation2 [shape = 'f32[1,16]{1,0:T(1,128)}', space=vmem, size = 0x200, scoped, tag = 'scratch operand']
  #allocation3 [shape = 'f32[1,16]{1,0:T(1,128)}', space=vmem, size = 0x200, scoped, tag = 'scratch operand']
  #allocation4 [shape = 'f32[1,1]{1,0:T(1,128)}', space=vmem, size = 0x200, scoped, tag = 'scratch operand']
  #allocation5 [shape = 'f32[1,1]{1,0:T(1,128)}', space=vmem, size = 0x200, scoped, tag = 'scratch operand']
  %s0 = inlined_call_operand.vmem [shape: f32[8,16], index: 0, kind: input, shape index: {}]
  %s1 = inlined_call_operand.vmem [shape: s32[8,1], index: 1, kind: input, shape index: {}]
  %s2 = inlined_call_operand.hbm [shape: f32[1,1], index: 2, kind: output, shape index: {0}]
  %s3 = inlined_call_operand.hbm [shape: f32[1,1], index: 3, kind: output, shape index: {1}]
  %4 = xla_tuple %s2, %s3
  %s5 = sld [smem:[#allocation0]]
  $region34: #{tpu_custom_call.1} parent=0
    _
  %s7 = ssub.s32 1, %s5
  %s8 = scalar_select 0, %s7, %s5
  $region1: #{tpu_custom_call.1} parent=0
    #allocation6 [shape = 'u8[512]{0}', space=vmem, size = 0x400, scoped, tag = 'output window, operand 0, single buffered']
    #allocation7 [shape = 's32[1]{0}', space=sflag, size = 0x4, scoped, tag = 'scoped memory for tpu_custom_call.1']
    #allocation8 [shape = 'u8[512]{0}', space=vmem, size = 0x400, scoped, tag = 'output window, operand 1, single buffered']
    #allocation9 [shape = 's32[1]{0}', space=sflag, size = 0x4, scoped, tag = 'scoped memory for tpu_custom_call.1']
    %9 = vsyncpa [#allocation7], 0
    %10 = vsyncpa [#allocation9], 0
    // Predicated region
    $region2: #{tpu_custom_call.1} parent=1 // pred_check
      _
    $region3: #{tpu_custom_call.1} parent=1 // pred_check_branch
      %12 = sbr.rel (0) target = $region5
    $region4: #{tpu_custom_call.1} parent=1 // pred_region
      _
    $region5: #{tpu_custom_call.1} parent=1 // pred_fallthru
      _
    // Predicated region
    $region6: #{tpu_custom_call.1} parent=1 // pred_check
      _
    $region7: #{tpu_custom_call.1} parent=1 // pred_check_branch
      %14 = sbr.rel (0) target = $region9
    $region8: #{tpu_custom_call.1} parent=1 // pred_region
      _
    $region9: #{tpu_custom_call.1} parent=1 // pred_fallthru
      _
    %p15 = scmp.eq.s32.totalorder 0, 0
    // Predicated region
    $region10: #{tpu_custom_call.1} parent=1 // pred_check
      %p16 = pneg %p15
    $region11: #{tpu_custom_call.1} parent=1 // pred_check_branch
      %18 = sbr.rel (%p16) target = $region13
    $region12: #{tpu_custom_call.1} parent=1 // pred_region
      %vm19 = vcmask 122880
      %20 = vst.msk [vmem:[#allocation2] sm:$0x1] %vm19, 0.0
      %21 = vst.msk [vmem:[#allocation3] sm:$0x1] %vm19, 0.0
      %vm22 = vcmask 0
      %23 = vst.msk [vmem:[#allocation4] sm:$0x1] %vm22, 0.0
      %24 = vst.msk [vmem:[#allocation5] sm:$0x1] %vm22, 0.0
    $region13: #{tpu_custom_call.1} parent=1 // pred_fallthru
      _
    %v25 = vld [vmem:[%s0] sm:$0xff]
    %v26 = vld [vmem:[%s1] sm:$0xff]
    %s27 = smul.u32 0, 8
    %v28 = vlaneseq
    %v29 = vshrl.u32 %v28, 7
    %v30 = vstv %s27
    %v31 = vadd.s32 %v30, %v29
    %vm32 = vcmp.lt.s32.totalorder %v31, 8
    %vm33 = vcmask 130048
    %v34 = vsel %vm33, %v25, -inf
    %35 = vmax.xlane.f32.xlu0 %v34
    %v36 = vpop.xlane.xlu0 %35
    %v37 = vsub.f32 %v25, %v36
    %v38 = vmul.f32 %v37, 1.442695
    %v39 = vpow.pop %v38
    %v40 = vsel %vm33, %v39, 0.0
    %41 = vadd.xlane.f32.xlu0 %v40
    %v42 = vpop.xlane.xlu0 %41
    %v43 = vrcp.pop %v42
    %v44 = vmul.f32 %v39, %v43
    %v45 = vlog2.pop %v42
    %v46 = vmul.f32 %v45, 0.6931472
    %v47 = vsub.f32 %v37, %v46
    %v48 = vlaneseq
    %v49 = vand.u32 %v48, 127
    %50 = vset.pattern.permute.xlu0 0
    %51 = vperm.xlu0 %50, %v26
    %v52 = vpop.permute.xlu0 %51
    %vm53 = vcmp.eq.s32.totalorder %v49, %v52
    %vm54 = vcmp.ne.s32.totalorder %v26, 4294967295
    %vm55 = vmand %vm54, %vm32
    %v56 = vsel %vm55, 1, 0
    %v57 = vcvt.s32.f32 %v56
    %v58 = vsel %vm53, %v47, 0.0
    %v59 = vsel %vm33, %v58, 0.0
    %60 = vadd.xlane.f32.xlu0 %v59
    %v61 = vpop.xlane.xlu0 %60
    %v62 = vld [vmem:[#allocation4] sm:$0x1]
    %v63 = vsub.f32 0.0, %v61
    %v64 = vmul.f32 %v63, %v57
    %vm65 = vcmask 7168
    %v66 = vsel %vm65, %v64, 0.0
    %v67 = vrot.slane %v66, 4
    %v68 = vadd.f32 %v66, %v67
    %v69 = vrot.slane %v68, 2
    %v70 = vadd.f32 %v68, %v69
    %v71 = vrot.slane %v70, 1
    %v72 = vadd.f32 %v70, %v71
    %v73 = vadd.f32 %v62, %v72
    %vm74 = vcmask 0
    %75 = vst.msk [vmem:[#allocation4] sm:$0x1] %vm74, %v73
    %v76 = vld [vmem:[#allocation5] sm:$0x1]
    %v77 = vsel %vm65, %v57, 0.0
    %v78 = vrot.slane %v77, 4
    %v79 = vadd.f32 %v77, %v78
    %v80 = vrot.slane %v79, 2
    %v81 = vadd.f32 %v79, %v80
    %v82 = vrot.slane %v81, 1
    %v83 = vadd.f32 %v81, %v82
    %v84 = vadd.f32 %v76, %v83
    %85 = vst.msk [vmem:[#allocation5] sm:$0x1] %vm74, %v84
    %v86 = vsel %vm32, 1, 0
    %vm87 = vcmp.eq.s32.totalorder %v86, 1
    %v88 = vsel %vm87, %v44, 0.0
    %vm89 = vmand %vm53, %vm87
    %v90 = vsel %vm89, 1.0, 0.0
    %v91 = vld [vmem:[#allocation2] sm:$0x1]
    %v92 = vsel %vm33, %v88, 0.0
    %v93 = vrot.slane %v92, 4
    %v94 = vadd.f32 %v92, %v93
    %v95 = vrot.slane %v94, 2
    %v96 = vadd.f32 %v94, %v95
    %v97 = vrot.slane %v96, 1
    %v98 = vadd.f32 %v96, %v97
    %v99 = vadd.f32 %v91, %v98
    %vm100 = vcmask 122880
    %101 = vst.msk [vmem:[#allocation2] sm:$0x1] %vm100, %v99
    %v102 = vld [vmem:[#allocation3] sm:$0x1]
    %v103 = vsel %vm33, %v90, 0.0
    %v104 = vrot.slane %v103, 4
    %v105 = vadd.f32 %v103, %v104
    %v106 = vrot.slane %v105, 2
    %v107 = vadd.f32 %v105, %v106
    %v108 = vrot.slane %v107, 1
    %v109 = vadd.f32 %v107, %v108
    %v110 = vadd.f32 %v102, %v109
    %111 = vst.msk [vmem:[#allocation3] sm:$0x1] %vm100, %v110
    // Predicated region
    $region14: #{tpu_custom_call.1} parent=1 // pred_check
      %p112 = pneg %p15
    $region15: #{tpu_custom_call.1} parent=1 // pred_check_branch
      %114 = sbr.rel (%p112) target = $region17
    $region16: #{tpu_custom_call.1} parent=1 // pred_region
      %v115 = vld [vmem:[#allocation4] sm:$0x1]
      %v116 = vld [vmem:[#allocation5] sm:$0x1]
      %v117 = vmax.f32 %v116, 1.0
      %v118 = vrcp.pop %v117
      %v119 = vmul.f32 %v115, %v118
      %120 = vst.msk [vmem:[#allocation6] sm:$0x1] %vm74, %v119
      %v121 = vld [vmem:[#allocation2] sm:$0x1]
      %v122 = vld [vmem:[#allocation3] sm:$0x1]
      %v123 = vsub.f32 %v121, %v122
      %v124 = vand.u32 2147483647, %v123
      %v125 = vsel %vm100, %v124, 0.0
      %126 = vadd.xlane.f32.xlu0 %v125
      %v127 = vpop.xlane.xlu0 %126
      %v128 = vrcp.pop 128.0
      %v129 = vmul.f32 %v127, %v128
      %130 = vst.msk [vmem:[#allocation8] sm:$0x1] %vm74, %v129
    $region17: #{tpu_custom_call.1} parent=1 // pred_fallthru
      _
    // Predicated region
    $region18: #{tpu_custom_call.1} parent=1 // pred_check
      _
    $region19: #{tpu_custom_call.1} parent=1 // pred_check_branch
      %132 = sbr.rel (0) target = $region21
    $region20: #{tpu_custom_call.1} parent=1 // pred_region
      %s134 = ssub.s32 16, 16
      %135 = vsyncadd [#allocation7], %s134
      %s137 = sshll.u32 [#allocation6], 4
      %s138 = int_to_ptr.vmem [resolvable:$true] %s137
      %140 = dma.vmem_to_hbm [thread:$0]  %s138, 16, %s2, [#allocation7]
    $region21: #{tpu_custom_call.1} parent=1 // pred_fallthru
      _
    // Predicated region
    $region22: #{tpu_custom_call.1} parent=1 // pred_check
      _
    $region23: #{tpu_custom_call.1} parent=1 // pred_check_branch
      %142 = sbr.rel (0) target = $region25
    $region24: #{tpu_custom_call.1} parent=1 // pred_region
      %s144 = ssub.s32 16, 16
      %145 = vsyncadd [#allocation9], %s144
      %s147 = sshll.u32 [#allocation8], 4
      %s148 = int_to_ptr.vmem [resolvable:$true] %s147
      %150 = dma.vmem_to_hbm [thread:$0]  %s148, 16, %s3, [#allocation9]
    $region25: #{tpu_custom_call.1} parent=1 // pred_fallthru
      _
    // Predicated region
    $region26: #{tpu_custom_call.1} parent=1 // pred_check
      _
    $region27: #{tpu_custom_call.1} parent=1 // pred_check_branch
      %152 = sbr.rel (0) target = $region29
    $region28: #{tpu_custom_call.1} parent=1 // pred_region
      %153 = dma.done [#allocation7], 16
    $region29: #{tpu_custom_call.1} parent=1 // pred_fallthru
      _
    // Predicated region
    $region30: #{tpu_custom_call.1} parent=1 // pred_check
      _
    $region31: #{tpu_custom_call.1} parent=1 // pred_check_branch
      %155 = sbr.rel (0) target = $region33
    $region32: #{tpu_custom_call.1} parent=1 // pred_region
      %156 = dma.done [#allocation9], 16
    $region33: #{tpu_custom_call.1} parent=1 // pred_fallthru
      _
    %157 = vsyncpa [#allocation7], 1
    %158 = vsyncpa [#allocation9], 1

</llo_original>
